<compile_context>
chip_gen: v7x
topology: tpu7x:2x2x1
jax: 0.10.0
libtpu: 0.0.40
codegen_flags: <defaults>
</compile_context>

<pallas_src>
import functools

import jax
import jax.numpy as jnp
from jax.experimental import pallas as pl
from jax.experimental.pallas import tpu as pltpu


# ---------------------------------------------------------------------------
# Fused kernel: one (OC_tile x F) dense-output slab per grid step.
#   out[oc, f] = bias[oc] + sum_{c,ky,kx} W[oc,c,ky,kx] * xflat[c, f + ky*Wp + kx]
# ---------------------------------------------------------------------------
def _make_fused_conv_kernel(K, Wp, F):
    def kernel(x_ref, w_ref, b_ref, o_ref):
        # x_ref: (1, C, L) bf16 ; w_ref: (K*K, OC_tile, C) bf16
        # b_ref: (OC_tile, 1) f32 ; o_ref: (1, OC_tile, F) out_dtype
        acc = None
        for ky in range(K):
            for kx in range(K):
                s = ky * Wp + kx                          # static flat shift
                x_win = x_ref[0, :, pl.ds(s, F)]          # (C, F) bf16 window
                part = jnp.dot(w_ref[ky * K + kx], x_win,
                               preferred_element_type=jnp.float32)
                acc = part if acc is None else acc + part
        o_ref[0] = (acc + b_ref[...]).astype(o_ref.dtype)
    return kernel


def _pick_oc_tile(oc_pad, c, l_flat, kk, f, out_itemsize,
                  budget_bytes=40 * 1024 * 1024):
    """Largest OC tile (multiple of 8 dividing oc_pad) whose blocks fit budget."""
    def est(toc):
        return (2 * c * l_flat * 2             # double-buffered bf16 input slab
                + 2 * kk * toc * c * 2         # double-buffered bf16 weights
                + 2 * toc * 4                  # bias
                + 2 * toc * f * out_itemsize   # double-buffered output block
                + 2 * toc * f * 4)             # f32 accumulator headroom
    cands = [d for d in range(8, oc_pad + 1, 8) if oc_pad % d == 0]
    for toc in sorted(cands, reverse=True):
        if est(toc) <= budget_bytes:
            return toc, est(toc)
    toc = cands[0]                             # smallest tile; huge-image case
    return toc, est(toc)


# ---------------------------------------------------------------------------
# ConvLayer forward: reflection pad (JAX) -> fused conv kernel -> crop/stride.
# ---------------------------------------------------------------------------
def conv_layer_forward(x, weight, bias, *, kernel_size, stride):
    """
    x:      [N, C, H, W]   (NCHW, like PyTorch)
    weight: [OC, C, K, K]  (PyTorch Conv2d layout)
    bias:   [OC]
    returns [N, OC, OH, OW] matching ReflectionPad2d(K//2) + Conv2d(stride).
    """
    N, C, H, W = x.shape
    OC = weight.shape[0]
    K = kernel_size
    pad = K // 2
    assert pad < H and pad < W, "ReflectionPad2d requires pad < spatial size"

    # Reflection padding (matches torch.nn.ReflectionPad2d); the bf16 cast
    # fuses into the same XLA pass, so the kernel reads one bf16 copy.
    xp = x
    if pad > 0:
        xp = jnp.pad(x, ((0, 0), (0, 0), (pad, pad), (pad, pad)), mode="reflect")
    Hp, Wp = H + 2 * pad, W + 2 * pad
    OH = (Hp - K) // stride + 1
    OW = (Wp - K) // stride + 1
    DH, DW = Hp - K + 1, Wp - K + 1            # dense (stride-1) output dims
    L = Hp * Wp                                # flattened padded image length
    F = (DH - 1) * Wp + DW                     # flattened dense output length
    KK = K * K

    xp_flat = xp.astype(jnp.bfloat16).reshape(N, C, L)             # [N, C, L]
    # weight [OC, C, K, K] -> [K*K, OC, C]  (w_kk[ky*K+kx] == weight[:,:,ky,kx])
    w_kk = jnp.transpose(weight, (2, 3, 0, 1)).reshape(KK, OC, C)
    w_kk = w_kk.astype(jnp.bfloat16)
    b_col = bias.reshape(OC, 1).astype(jnp.float32)

    OC_pad = ((OC + 7) // 8) * 8               # sublane-aligned OC tiling
    if OC_pad != OC:
        w_kk = jnp.pad(w_kk, ((0, 0), (0, OC_pad - OC), (0, 0)))
        b_col = jnp.pad(b_col, ((0, OC_pad - OC), (0, 0)))

    out_dtype = x.dtype
    TOC, vmem_need = _pick_oc_tile(OC_pad, C, L, KK, F,
                                   jnp.dtype(out_dtype).itemsize)
    vmem_limit = int(max(32 * 1024 * 1024,
                         min(vmem_need * 5 // 4 + (2 << 20),
                             100 * 1024 * 1024)))

    out_flat = pl.pallas_call(
        _make_fused_conv_kernel(K, Wp, F),
        out_shape=jax.ShapeDtypeStruct((N, OC_pad, F), out_dtype),
        grid_spec=pltpu.PrefetchScalarGridSpec(
            num_scalar_prefetch=0,
            grid=(N, OC_pad // TOC),
            in_specs=[
                # Full padded-image slab; constant over the OC axis -> stays
                # resident in VMEM across OC tiles of the same image.
                pl.BlockSpec((1, C, L), lambda n, oc: (n, 0, 0)),
                pl.BlockSpec((KK, TOC, C), lambda n, oc: (0, oc, 0)),
                pl.BlockSpec((TOC, 1), lambda n, oc: (oc, 0)),
            ],
            out_specs=pl.BlockSpec((1, TOC, F), lambda n, oc: (n, oc, 0)),
        ),
        compiler_params=pltpu.CompilerParams(
            dimension_semantics=("parallel", "parallel"),
            vmem_limit_bytes=vmem_limit),
    )(xp_flat, w_kk, b_col)                                  # [N, OC_pad, F]

    # Un-flatten the dense output and crop the padded-width garbage columns.
    tail = DH * Wp - F                                        # == K - 1
    if tail:
        out_flat = jnp.pad(out_flat, ((0, 0), (0, 0), (0, tail)))
    out = out_flat.reshape(N, OC_pad, DH, Wp)[:, :OC, :, :DW]
    if stride > 1:
        out = out[:, :, ::stride, ::stride]    # dense conv -> strided conv
    return out                                  # [N, OC, OH, OW]


# ---------------------------------------------------------------------------
# Deterministic parameter init (mirrors torch Conv2d default shapes/bounds).
# ---------------------------------------------------------------------------
def init_conv_params(key, in_channels, out_channels, kernel_size):
    fan_in = in_channels * kernel_size * kernel_size
    bound = 1.0 / jnp.sqrt(jnp.float32(fan_in))
    kw, kb = jax.random.split(key)
    weight = jax.random.uniform(
        kw, (out_channels, in_channels, kernel_size, kernel_size),
        dtype=jnp.float32, minval=-bound, maxval=bound)
    bias = jax.random.uniform(
        kb, (out_channels,), dtype=jnp.float32, minval=-bound, maxval=bound)
    return weight, bias


if __name__ == "__main__":
    # Module config: ConvLayer(in_channels=4, out_channels=8, kernel_size=3, stride=1)
    in_channels, out_channels, kernel_size, stride = 4, 8, 3, 1
    N, H, W = 2, 16, 16

    key = jax.random.PRNGKey(0)
    kx_, kparams = jax.random.split(key)
    x = jax.random.normal(kx_, (N, in_channels, H, W), dtype=jnp.float32)
    weight, bias = init_conv_params(kparams, in_channels, out_channels, kernel_size)

    fwd = jax.jit(functools.partial(
        conv_layer_forward, kernel_size=kernel_size, stride=stride))
    out = jax.block_until_ready(fwd(x, weight, bias))

    # Reference: reflection pad + conv with the same bf16-rounded operands
    # (f32 math), so the check measures the kernel, not the bf16 cast.
    pad = kernel_size // 2
    xp = jnp.pad(x, ((0, 0), (0, 0), (pad, pad), (pad, pad)), mode="reflect")
    ref = jax.lax.conv_general_dilated(
        xp.astype(jnp.bfloat16).astype(jnp.float32),
        weight.astype(jnp.bfloat16).astype(jnp.float32),
        window_strides=(stride, stride), padding="VALID",
        dimension_numbers=("NCHW", "OIHW", "NCHW")) + bias[None, :, None, None]

    assert out.shape == (N, out_channels, H, W), out.shape
    err = float(jnp.max(jnp.abs(out - ref)))
    assert jnp.allclose(out, ref, atol=1e-2, rtol=1e-2), err

    print("KERNEL_OK")
</pallas_src>

<mosaic_0001>
module attributes {stable_mosaic.version = 11 : i64} {
  func.func @kernel(%arg0: i32, %arg1: i32, %arg2: memref<1x4x324xbf16, #tpu.memory_space<vmem>>, %arg3: memref<9x8x4xbf16, #tpu.memory_space<vmem>>, %arg4: memref<8x1xf32, #tpu.memory_space<vmem>>, %arg5: memref<1x8x286xf32, #tpu.memory_space<vmem>>) attributes {dimension_semantics = [#tpu.dimension_semantics<parallel>, #tpu.dimension_semantics<parallel>], iteration_bounds = array<i64: 2, 1>, scalar_prefetch = 0 : i64, scratch_operands = 0 : i64, tpu.core_type = #tpu.core_type<tc>, window_params = [{transform_indices = @transform_0, window_bounds = array<i64: 1, 4, 324>}, {transform_indices = @transform_1, window_bounds = array<i64: 9, 8, 4>}, {transform_indices = @transform_2, window_bounds = array<i64: 8, 1>}, {transform_indices = @transform_3, window_bounds = array<i64: 1, 8, 286>}]} {
    %c0 = arith.constant 0 : index
    %c0_0 = arith.constant 0 : index
    %c0_1 = arith.constant 0 : index
    %0 = vector.load %arg2[%c0, %c0_0, %c0_1] : memref<1x4x324xbf16, #tpu.memory_space<vmem>>, vector<1x4x286xbf16>
    %1 = vector.shape_cast %0 : vector<1x4x286xbf16> to vector<4x286xbf16>
    %c0_2 = arith.constant 0 : index
    %c0_3 = arith.constant 0 : index
    %c0_4 = arith.constant 0 : index
    %2 = vector.load %arg3[%c0_2, %c0_3, %c0_4] : memref<9x8x4xbf16, #tpu.memory_space<vmem>>, vector<1x8x4xbf16>
    %3 = vector.shape_cast %2 : vector<1x8x4xbf16> to vector<8x4xbf16>
    %cst = arith.constant dense<0.000000e+00> : vector<8x286xf32>
    %4 = tpu.matmul %3, %1, %cst {dimension_numbers = #tpu.dot_dimension_numbers<[1], [0], [0], [1], [0, 0, 1, 1], [], []>} : vector<8x4xbf16>, vector<4x286xbf16>, vector<8x286xf32> -> vector<8x286xf32>
    %c0_5 = arith.constant 0 : index
    %c0_6 = arith.constant 0 : index
    %c1 = arith.constant 1 : index
    %5 = vector.load %arg2[%c0_5, %c0_6, %c1] : memref<1x4x324xbf16, #tpu.memory_space<vmem>>, vector<1x4x286xbf16>
    %6 = vector.shape_cast %5 : vector<1x4x286xbf16> to vector<4x286xbf16>
    %c1_7 = arith.constant 1 : index
    %c0_8 = arith.constant 0 : index
    %c0_9 = arith.constant 0 : index
    %7 = vector.load %arg3[%c1_7, %c0_8, %c0_9] : memref<9x8x4xbf16, #tpu.memory_space<vmem>>, vector<1x8x4xbf16>
    %8 = vector.shape_cast %7 : vector<1x8x4xbf16> to vector<8x4xbf16>
    %cst_10 = arith.constant dense<0.000000e+00> : vector<8x286xf32>
    %9 = tpu.matmul %8, %6, %cst_10 {dimension_numbers = #tpu.dot_dimension_numbers<[1], [0], [0], [1], [0, 0, 1, 1], [], []>} : vector<8x4xbf16>, vector<4x286xbf16>, vector<8x286xf32> -> vector<8x286xf32>
    %10 = arith.addf %4, %9 : vector<8x286xf32>
    %c0_11 = arith.constant 0 : index
    %c0_12 = arith.constant 0 : index
    %c2 = arith.constant 2 : index
    %11 = vector.load %arg2[%c0_11, %c0_12, %c2] : memref<1x4x324xbf16, #tpu.memory_space<vmem>>, vector<1x4x286xbf16>
    %12 = vector.shape_cast %11 : vector<1x4x286xbf16> to vector<4x286xbf16>
    %c2_13 = arith.constant 2 : index
    %c0_14 = arith.constant 0 : index
    %c0_15 = arith.constant 0 : index
    %13 = vector.load %arg3[%c2_13, %c0_14, %c0_15] : memref<9x8x4xbf16, #tpu.memory_space<vmem>>, vector<1x8x4xbf16>
    %14 = vector.shape_cast %13 : vector<1x8x4xbf16> to vector<8x4xbf16>
    %cst_16 = arith.constant dense<0.000000e+00> : vector<8x286xf32>
    %15 = tpu.matmul %14, %12, %cst_16 {dimension_numbers = #tpu.dot_dimension_numbers<[1], [0], [0], [1], [0, 0, 1, 1], [], []>} : vector<8x4xbf16>, vector<4x286xbf16>, vector<8x286xf32> -> vector<8x286xf32>
    %16 = arith.addf %10, %15 : vector<8x286xf32>
    %c0_17 = arith.constant 0 : index
    %c0_18 = arith.constant 0 : index
    %c18 = arith.constant 18 : index
    %17 = vector.load %arg2[%c0_17, %c0_18, %c18] : memref<1x4x324xbf16, #tpu.memory_space<vmem>>, vector<1x4x286xbf16>
    %18 = vector.shape_cast %17 : vector<1x4x286xbf16> to vector<4x286xbf16>
    %c3 = arith.constant 3 : index
    %c0_19 = arith.constant 0 : index
    %c0_20 = arith.constant 0 : index
    %19 = vector.load %arg3[%c3, %c0_19, %c0_20] : memref<9x8x4xbf16, #tpu.memory_space<vmem>>, vector<1x8x4xbf16>
    %20 = vector.shape_cast %19 : vector<1x8x4xbf16> to vector<8x4xbf16>
    %cst_21 = arith.constant dense<0.000000e+00> : vector<8x286xf32>
    %21 = tpu.matmul %20, %18, %cst_21 {dimension_numbers = #tpu.dot_dimension_numbers<[1], [0], [0], [1], [0, 0, 1, 1], [], []>} : vector<8x4xbf16>, vector<4x286xbf16>, vector<8x286xf32> -> vector<8x286xf32>
    %22 = arith.addf %16, %21 : vector<8x286xf32>
    %c0_22 = arith.constant 0 : index
    %c0_23 = arith.constant 0 : index
    %c19 = arith.constant 19 : index
    %23 = vector.load %arg2[%c0_22, %c0_23, %c19] : memref<1x4x324xbf16, #tpu.memory_space<vmem>>, vector<1x4x286xbf16>
    %24 = vector.shape_cast %23 : vector<1x4x286xbf16> to vector<4x286xbf16>
    %c4 = arith.constant 4 : index
    %c0_24 = arith.constant 0 : index
    %c0_25 = arith.constant 0 : index
    %25 = vector.load %arg3[%c4, %c0_24, %c0_25] : memref<9x8x4xbf16, #tpu.memory_space<vmem>>, vector<1x8x4xbf16>
    %26 = vector.shape_cast %25 : vector<1x8x4xbf16> to vector<8x4xbf16>
    %cst_26 = arith.constant dense<0.000000e+00> : vector<8x286xf32>
    %27 = tpu.matmul %26, %24, %cst_26 {dimension_numbers = #tpu.dot_dimension_numbers<[1], [0], [0], [1], [0, 0, 1, 1], [], []>} : vector<8x4xbf16>, vector<4x286xbf16>, vector<8x286xf32> -> vector<8x286xf32>
    %28 = arith.addf %22, %27 : vector<8x286xf32>
    %c0_27 = arith.constant 0 : index
    %c0_28 = arith.constant 0 : index
    %c20 = arith.constant 20 : index
    %29 = vector.load %arg2[%c0_27, %c0_28, %c20] : memref<1x4x324xbf16, #tpu.memory_space<vmem>>, vector<1x4x286xbf16>
    %30 = vector.shape_cast %29 : vector<1x4x286xbf16> to vector<4x286xbf16>
    %c5 = arith.constant 5 : index
    %c0_29 = arith.constant 0 : index
    %c0_30 = arith.constant 0 : index
    %31 = vector.load %arg3[%c5, %c0_29, %c0_30] : memref<9x8x4xbf16, #tpu.memory_space<vmem>>, vector<1x8x4xbf16>
    %32 = vector.shape_cast %31 : vector<1x8x4xbf16> to vector<8x4xbf16>
    %cst_31 = arith.constant dense<0.000000e+00> : vector<8x286xf32>
    %33 = tpu.matmul %32, %30, %cst_31 {dimension_numbers = #tpu.dot_dimension_numbers<[1], [0], [0], [1], [0, 0, 1, 1], [], []>} : vector<8x4xbf16>, vector<4x286xbf16>, vector<8x286xf32> -> vector<8x286xf32>
    %34 = arith.addf %28, %33 : vector<8x286xf32>
    %c0_32 = arith.constant 0 : index
    %c0_33 = arith.constant 0 : index
    %c36 = arith.constant 36 : index
    %35 = vector.load %arg2[%c0_32, %c0_33, %c36] : memref<1x4x324xbf16, #tpu.memory_space<vmem>>, vector<1x4x286xbf16>
    %36 = vector.shape_cast %35 : vector<1x4x286xbf16> to vector<4x286xbf16>
    %c6 = arith.constant 6 : index
    %c0_34 = arith.constant 0 : index
    %c0_35 = arith.constant 0 : index
    %37 = vector.load %arg3[%c6, %c0_34, %c0_35] : memref<9x8x4xbf16, #tpu.memory_space<vmem>>, vector<1x8x4xbf16>
    %38 = vector.shape_cast %37 : vector<1x8x4xbf16> to vector<8x4xbf16>
    %cst_36 = arith.constant dense<0.000000e+00> : vector<8x286xf32>
    %39 = tpu.matmul %38, %36, %cst_36 {dimension_numbers = #tpu.dot_dimension_numbers<[1], [0], [0], [1], [0, 0, 1, 1], [], []>} : vector<8x4xbf16>, vector<4x286xbf16>, vector<8x286xf32> -> vector<8x286xf32>
    %40 = arith.addf %34, %39 : vector<8x286xf32>
    %c0_37 = arith.constant 0 : index
    %c0_38 = arith.constant 0 : index
    %c37 = arith.constant 37 : index
    %41 = vector.load %arg2[%c0_37, %c0_38, %c37] : memref<1x4x324xbf16, #tpu.memory_space<vmem>>, vector<1x4x286xbf16>
    %42 = vector.shape_cast %41 : vector<1x4x286xbf16> to vector<4x286xbf16>
    %c7 = arith.constant 7 : index
    %c0_39 = arith.constant 0 : index
    %c0_40 = arith.constant 0 : index
    %43 = vector.load %arg3[%c7, %c0_39, %c0_40] : memref<9x8x4xbf16, #tpu.memory_space<vmem>>, vector<1x8x4xbf16>
    %44 = vector.shape_cast %43 : vector<1x8x4xbf16> to vector<8x4xbf16>
    %cst_41 = arith.constant dense<0.000000e+00> : vector<8x286xf32>
    %45 = tpu.matmul %44, %42, %cst_41 {dimension_numbers = #tpu.dot_dimension_numbers<[1], [0], [0], [1], [0, 0, 1, 1], [], []>} : vector<8x4xbf16>, vector<4x286xbf16>, vector<8x286xf32> -> vector<8x286xf32>
    %46 = arith.addf %40, %45 : vector<8x286xf32>
    %c0_42 = arith.constant 0 : index
    %c0_43 = arith.constant 0 : index
    %c38 = arith.constant 38 : index
    %47 = vector.load %arg2[%c0_42, %c0_43, %c38] : memref<1x4x324xbf16, #tpu.memory_space<vmem>>, vector<1x4x286xbf16>
    %48 = vector.shape_cast %47 : vector<1x4x286xbf16> to vector<4x286xbf16>
    %c8 = arith.constant 8 : index
    %c0_44 = arith.constant 0 : index
    %c0_45 = arith.constant 0 : index
    %49 = vector.load %arg3[%c8, %c0_44, %c0_45] : memref<9x8x4xbf16, #tpu.memory_space<vmem>>, vector<1x8x4xbf16>
    %50 = vector.shape_cast %49 : vector<1x8x4xbf16> to vector<8x4xbf16>
    %cst_46 = arith.constant dense<0.000000e+00> : vector<8x286xf32>
    %51 = tpu.matmul %50, %48, %cst_46 {dimension_numbers = #tpu.dot_dimension_numbers<[1], [0], [0], [1], [0, 0, 1, 1], [], []>} : vector<8x4xbf16>, vector<4x286xbf16>, vector<8x286xf32> -> vector<8x286xf32>
    %52 = arith.addf %46, %51 : vector<8x286xf32>
    %c0_47 = arith.constant 0 : index
    %c0_48 = arith.constant 0 : index
    %53 = vector.load %arg4[%c0_47, %c0_48] : memref<8x1xf32, #tpu.memory_space<vmem>>, vector<8x1xf32>
    %54 = vector.broadcast %53 : vector<8x1xf32> to vector<8x286xf32>
    %55 = arith.addf %52, %54 : vector<8x286xf32>
    %c0_49 = arith.constant 0 : index
    %c0_50 = arith.constant 0 : index
    %c0_51 = arith.constant 0 : index
    %56 = vector.load %arg5[%c0_49, %c0_50, %c0_51] : memref<1x8x286xf32, #tpu.memory_space<vmem>>, vector<1x8x286xf32>
    %57 = vector.shape_cast %56 : vector<1x8x286xf32> to vector<8x286xf32>
    %58 = vector.shape_cast %55 : vector<8x286xf32> to vector<1x8x286xf32>
    tpu.vector_store %arg5[%c0_49, %c0_50, %c0_51], %58 {strides = array<i32>} : memref<1x8x286xf32, #tpu.memory_space<vmem>>, vector<1x8x286xf32>,
    return
  }
  func.func @transform_0(%arg0: i32, %arg1: i32) -> (i32, i32, i32) {
    %c0_i32 = arith.constant 0 : i32
    %c0_i32_0 = arith.constant 0 : i32
    %c0_i32_1 = arith.constant 0 : i32
    return %arg0, %c0_i32, %c0_i32_0 : i32, i32, i32
  }
  func.func @transform_1(%arg0: i32, %arg1: i32) -> (i32, i32, i32) {
    %c0_i32 = arith.constant 0 : i32
    %c0_i32_0 = arith.constant 0 : i32
    %c0_i32_1 = arith.constant 0 : i32
    return %c0_i32, %arg1, %c0_i32_0 : i32, i32, i32
  }
  func.func @transform_2(%arg0: i32, %arg1: i32) -> (i32, i32) {
    %c0_i32 = arith.constant 0 : i32
    %c0_i32_0 = arith.constant 0 : i32
    return %arg1, %c0_i32 : i32, i32
  }
  func.func @transform_3(%arg0: i32, %arg1: i32) -> (i32, i32, i32) {
    %c0_i32 = arith.constant 0 : i32
    %c0_i32_0 = arith.constant 0 : i32
    return %arg0, %arg1, %c0_i32 : i32, i32, i32
  }
}

</mosaic_0001>

<llo_original>
// kernel: conv_layer_forward.1
$region0: #{conv_layer_forward.1}
  #allocation0 [shape = 'u32[]', space=smem, size = 0x4, offset = 0x4, fixed_abs, tag = 'smem constant byte address 0x4 - core index']
  #allocation1 [shape = 'u32[144,128]{1,0:T(1,128)}', space=vmem, size = 0x12000, scoped, tag = 'internal scratch']
  %s0 = inlined_call_operand.vmem [shape: bf16[2,4,324], index: 0, kind: input, shape index: {}]
  %s1 = inlined_call_operand.vmem [shape: bf16[9,8,4], index: 1, kind: input, shape index: {}]
  %s2 = inlined_call_operand.vmem [shape: f32[8,1], index: 2, kind: input, shape index: {}]
  %s3 = inlined_call_operand.vmem [shape: f32[2,8,286], index: 3, kind: output, shape index: {}]
  %s4 = sld [smem:[#allocation0]]
  $region45: #{conv_layer_forward.1} parent=0
    _
  %s6 = ssub.s32 1, %s4
  %s7 = scalar_select 0, %s6, %s4
  loop: start=0, step=1, limit=4
  $region2: #{conv_layer_forward.1} parent=0 // loop_pre_header
    _
  $region3: #{conv_layer_forward.1} parent=0 // loop_header
    %s9 = sphi 0, %s13
    %p10 = scmp.ge.s32.totalorder %s9, 4
    %s16 = sphi 0, %s28
    %s17 = sphi 0, %s24
    %s18 = sphi 0, %s16
    %s19 = sphi 0, %s17
    %s20 = sphi 0, %s18
    %s21 = sphi 0, %s19
    %s31 = sphi 0, %s33
    %s34 = sphi 0, %s31
    %s35 = sphi 0, %s34
    %s51 = sphi 0, %s35
    %s57 = sphi 0, %s59
    %s60 = sphi 0, %s57
    %s61 = sphi 0, %s60
    %s77 = sphi 0, %s61
    %s83 = sphi 0, %s85
    %s86 = sphi 0, %s83
    %s87 = sphi 0, %s86
    %s103 = sphi 0, %s87
    %s111 = sphi 0, %s113
    %s114 = sphi 0, %s111
    %s115 = sphi 0, %s114
    %s131 = sphi 0, %s115
  $region4: #{conv_layer_forward.1} parent=0 // loop_header_branch
    %12 = sbr.rel (%p10) target = $region8
  $region5: #{conv_layer_forward.1} parent=0 // loop_body
    %s14 = ssub.s32 %s9, 1
    %s15 = ssub.s32 %s9, 2
    %s22 = sadd.s32 1, %s17
    %p23 = scmp.ge.s32.totalorder %s22, 1
    %s24 = scalar_select %p23, 0, %s22
    %s25 = sadd.s32 1, %s16
    %s26 = scalar_select %p23, %s25, %s16
    %p27 = scmp.ge.s32.totalorder %s26, 2
    %s28 = scalar_select %p27, 0, %s26
    %s29 = ssub.s32 %s16, %s28
    %p30 = scmp.eq.s32.totalorder %s29, 0
    %s32 = sadd.s32 %s31, 1
    %s33 = scalar_select %p30, %s31, %s32
    %p36 = pneg %p30
    %p37 = scmp.eq.s32.totalorder %s9, 1
    %p38 = por %p36, %p37
    %p39 = scmp.ne.s32.totalorder %s31, %s34
    %p40 = scmp.eq.s32.totalorder %s9, 0
    %p41 = por %p39, %p40
    %p42 = scmp.ne.s32.totalorder %s31, %s34
    %p43 = scmp.eq.s32.totalorder %s14, 1
    %p44 = por %p42, %p43
    %p45 = scmp.ne.s32.totalorder %s34, %s35
    %p46 = scmp.eq.s32.totalorder %s14, 0
    %p47 = por %p45, %p46
    %p48 = scmp.ne.s32.totalorder %s34, %s35
    %p49 = scmp.eq.s32.totalorder %s15, 1
    %p50 = por %p48, %p49
    %p52 = scmp.ne.s32.totalorder %s35, %s51
    %p53 = scmp.eq.s32.totalorder %s15, 0
    %p54 = por %p52, %p53
    %s55 = ssub.s32 %s17, %s24
    %p56 = scmp.eq.s32.totalorder %s55, 0
    %s58 = sadd.s32 %s57, 1
    %s59 = scalar_select %p56, %s57, %s58
    %p62 = pneg %p56
    %p63 = scmp.eq.s32.totalorder %s9, 1
    %p64 = por %p62, %p63
    %p65 = scmp.ne.s32.totalorder %s57, %s60
    %p66 = scmp.eq.s32.totalorder %s9, 0
    %p67 = por %p65, %p66
    %p68 = scmp.ne.s32.totalorder %s57, %s60
    %p69 = scmp.eq.s32.totalorder %s14, 1
    %p70 = por %p68, %p69
    %p71 = scmp.ne.s32.totalorder %s60, %s61
    %p72 = scmp.eq.s32.totalorder %s14, 0
    %p73 = por %p71, %p72
    %p74 = scmp.ne.s32.totalorder %s60, %s61
    %p75 = scmp.eq.s32.totalorder %s15, 1
    %p76 = por %p74, %p75
    %p78 = scmp.ne.s32.totalorder %s61, %s77
    %p79 = scmp.eq.s32.totalorder %s15, 0
    %p80 = por %p78, %p79
    %s81 = ssub.s32 %s17, %s24
    %p82 = scmp.eq.s32.totalorder %s81, 0
    %s84 = sadd.s32 %s83, 1
    %s85 = scalar_select %p82, %s83, %s84
    %p88 = pneg %p82
    %p89 = scmp.eq.s32.totalorder %s9, 1
    %p90 = por %p88, %p89
    %p91 = scmp.ne.s32.totalorder %s83, %s86
    %p92 = scmp.eq.s32.totalorder %s9, 0
    %p93 = por %p91, %p92
    %p94 = scmp.ne.s32.totalorder %s83, %s86
    %p95 = scmp.eq.s32.totalorder %s14, 1
    %p96 = por %p94, %p95
    %p97 = scmp.ne.s32.totalorder %s86, %s87
    %p98 = scmp.eq.s32.totalorder %s14, 0
    %p99 = por %p97, %p98
    %p100 = scmp.ne.s32.totalorder %s86, %s87
    %p101 = scmp.eq.s32.totalorder %s15, 1
    %p102 = por %p100, %p101
    %p104 = scmp.ne.s32.totalorder %s87, %s103
    %p105 = scmp.eq.s32.totalorder %s15, 0
    %p106 = por %p104, %p105
    %s107 = ssub.s32 %s16, %s28
    %s108 = ssub.s32 %s17, %s24
    %s109 = sor.u32 %s107, %s108
    %p110 = scmp.eq.s32.totalorder %s109, 0
    %s112 = sadd.s32 %s111, 1
    %s113 = scalar_select %p110, %s111, %s112
    %p116 = pneg %p110
    %p117 = scmp.eq.s32.totalorder %s9, 1
    %p118 = por %p116, %p117
    %p119 = scmp.ne.s32.totalorder %s111, %s114
    %p120 = scmp.eq.s32.totalorder %s9, 0
    %p121 = por %p119, %p120
    %p122 = scmp.ne.s32.totalorder %s111, %s114
    %p123 = scmp.eq.s32.totalorder %s14, 1
    %p124 = por %p122, %p123
    %p125 = scmp.ne.s32.totalorder %s114, %s115
    %p126 = scmp.eq.s32.totalorder %s14, 0
    %p127 = por %p125, %p126
    %p128 = scmp.ne.s32.totalorder %s114, %s115
    %p129 = scmp.eq.s32.totalorder %s15, 1
    %p130 = por %p128, %p129
    %p132 = scmp.ne.s32.totalorder %s115, %s131
    %p133 = scmp.eq.s32.totalorder %s15, 0
    %p134 = por %p132, %p133
    %p135 = scmp.le.s32.totalorder 1, %s9
    %p136 = scmp.lt.s32.totalorder %s9, 3
    %p137 = pnand %p135, %p136
    %p138 = pneg %p137
    // Predicated region
    $region9: #{conv_layer_forward.1} parent=5 // pred_check
      _
    $region10: #{conv_layer_forward.1} parent=5 // pred_check_branch
      %140 = sbr.rel (%p137) target = $region12
    $region11: #{conv_layer_forward.1} parent=5 // pred_region
      %s141 = ssub.s32 %s9, 1
      // Predicated region
      $region13: #{conv_layer_forward.1} parent=11 // pred_check
        %p142 = pneg %p73
      $region14: #{conv_layer_forward.1} parent=11 // pred_check_branch
        %144 = sbr.rel (%p142) target = $region16
      $region15: #{conv_layer_forward.1} parent=11 // pred_region
        %p145 = scmp.lt.s32.totalorder %s19, 0
        %s146 = scalar_select %p145, %s19, 0
        %s147 = smul.addr %s146, 4
        %s148 = scalar_lea.vmem %s1, %s147
      $region16: #{conv_layer_forward.1} parent=11 // pred_fallthru
        _
      // Predicated region
      $region17: #{conv_layer_forward.1} parent=11 // pred_check
        %p149 = pneg %p99
      $region18: #{conv_layer_forward.1} parent=11 // pred_check_branch
        %151 = sbr.rel (%p149) target = $region20
      $region19: #{conv_layer_forward.1} parent=11 // pred_region
        %p152 = scmp.lt.s32.totalorder %s19, 0
        %s153 = scalar_select %p152, %s19, 0
        %s154 = smul.addr %s153, 8
        %s155 = scalar_lea.vmem %s2, %s154
      $region20: #{conv_layer_forward.1} parent=11 // pred_fallthru
        _
    $region12: #{conv_layer_forward.1} parent=5 // pred_fallthru
      _
    %p156 = scmp.lt.s32.totalorder %s9, 2
    // Predicated region
    $region21: #{conv_layer_forward.1} parent=5 // pred_check
      %p157 = pneg %p156
    $region22: #{conv_layer_forward.1} parent=5 // pred_check_branch
      %159 = sbr.rel (%p157) target = $region24
    $region23: #{conv_layer_forward.1} parent=5 // pred_region
      // Predicated region
      $region25: #{conv_layer_forward.1} parent=23 // pred_check
        %p160 = pneg %p41
      $region26: #{conv_layer_forward.1} parent=23 // pred_check_branch
        %162 = sbr.rel (%p160) target = $region28
      $region27: #{conv_layer_forward.1} parent=23 // pred_region
        %p163 = scmp.lt.s32.totalorder %s16, 1
        %s164 = scalar_select %p163, %s16, 1
        %s165 = smul.addr %s164, 3
        %s166 = smul.addr %s165, 2
        %s167 = scalar_lea.vmem %s0, %s166
      $region28: #{conv_layer_forward.1} parent=23 // pred_fallthru
        _
    $region24: #{conv_layer_forward.1} parent=5 // pred_fallthru
      _
    %p168 = scmp.le.s32.totalorder 1, %s9
    %p169 = scmp.lt.s32.totalorder %s9, 3
    %p170 = pnand %p168, %p169
    %p171 = pneg %p170
    // Predicated region
    $region29: #{conv_layer_forward.1} parent=5 // pred_check
      _
    $region30: #{conv_layer_forward.1} parent=5 // pred_check_branch
      %173 = sbr.rel (%p170) target = $region32
    $region31: #{conv_layer_forward.1} parent=5 // pred_region
      %s174 = ssub.s32 %s9, 1
      %p175 = scmp.lt.s32.totalorder %s18, 1
      %s176 = scalar_select %p175, %s18, 1
      %s177 = smul.addr %s176, 3
      %s178 = smul.addr %s177, 2
      %s179 = scalar_lea.vmem %s0, %s178
      %p180 = pneg %p47
      %p181 = pneg %p44
      %p182 = scmp.lt.s32.totalorder %s19, 0
      %s183 = scalar_select %p182, %s19, 0
      %s184 = smul.addr %s183, 4
      %s185 = scalar_lea.vmem %s1, %s184
      %p186 = pneg %p73
      %p187 = pneg %p70
      %p188 = scmp.lt.s32.totalorder %s19, 0
      %s189 = scalar_select %p188, %s19, 0
      %s190 = smul.addr %s189, 8
      %s191 = scalar_lea.vmem %s2, %s190
      %p192 = pneg %p99
      %p193 = pneg %p96
      %p194 = pneg %p127
      %p195 = pneg %p124
      %p196 = scmp.lt.s32.totalorder %s18, 1
      %s197 = scalar_select %p196, %s18, 1
      %p198 = scmp.lt.s32.totalorder %s19, 0
      %s199 = scalar_select %p198, %s19, 0
      %s200 = smul.addr %s199, 3
      %s201 = smul.addr %s197, 3
      %s202 = sadd.s32 %s200, %s201
      %s203 = smul.addr %s202, 8
      %s204 = scalar_lea.vmem %s3, %s203
      %p205 = scmp.lt.s32.totalorder %s18, 1
      %s206 = scalar_select %p205, %s18, 1
      %s207 = smul.addr %s206, 3
      %s208 = smul.addr %s207, 2
      %s209 = scalar_lea.vmem %s0, %s208
      %p210 = scmp.lt.s32.totalorder %s19, 0
      %s211 = scalar_select %p210, %s19, 0
      %s212 = smul.addr %s211, 4
      %s213 = scalar_lea.vmem %s1, %s212
      %p214 = scmp.lt.s32.totalorder %s19, 0
      %s215 = scalar_select %p214, %s19, 0
      %s216 = smul.addr %s215, 8
      %s217 = scalar_lea.vmem %s2, %s216
      %p218 = scmp.lt.s32.totalorder %s18, 1
      %s219 = scalar_select %p218, %s18, 1
      %p220 = scmp.lt.s32.totalorder %s19, 0
      %s221 = scalar_select %p220, %s19, 0
      %s222 = smul.addr %s221, 3
      %s223 = smul.addr %s219, 3
      %s224 = sadd.s32 %s222, %s223
      %s225 = smul.addr %s224, 8
      %s226 = scalar_lea.vmem %s3, %s225
      %v228 = vld [vmem:[%s209] sm:$0x3f]
      %v229 = vld [vmem:[%s213] sm:$0xf]
      %s230 = scalar_lea.vmem %s213, 4
      %v231 = vld [vmem:[%s230] sm:$0xf]
      %v233 = vcombine.high %v228, %v228
      %v235 = vunpack.c.l.s4 1983009808
      %v236 = vunpack.c.0.s8 %v235
      %v237 = vlaneseq
      %v238 = vshrl.u32 %v237, 7
      %v239 = vsub.s32 %v236, %v238
      %v240 = vrot.slane %v228, %v239
      %v242 = vunpack.c.l.s4 1983009808
      %v243 = vunpack.c.0.s8 %v242
      %v244 = vlaneseq
      %v245 = vshrl.u32 %v244, 7
      %v246 = vsub.s32 %v243, %v245
      %v247 = vrot.slane %v233, %v246
      %v248 = vcombine.high %v240, %v240
      %249 = vrot.lane.b32.xlu0 %v240, 127
      %v250 = vpop.permute.xlu0 %249
      %251 = vrot.lane.b32.xlu0 %v248, 127
      %v252 = vpop.permute.xlu0 %251
      %253 = vrot.lane.b32.xlu0 %v247, 127
      %v254 = vpop.permute.xlu0 %253
      %vm255 = vcmask 1039360
      %v256 = vsel %vm255, %v250, %v252
      %v257 = vsel %vm255, %v252, %v254
      %vm258 = vcmask 31744
      %v260 = vsel %vm258, %v231, 0
      %vm262 = vcmask 1041408
      %v264 = vsel %vm262, %v256, 0
      %v267 = vsel %vm262, %v257, 0
      %v270 = vsel %vm262, %v254, 0
      %272 = vmatprep.subr.bf16.mxu0 %v267
      %273 = vmatpush1.bf16.msra.mxu0 %v264
      %274 = vmatprep.subr.bf16.mxu0 0
      %275 = vmatpush1.bf16.msra.mxu0 0
      %276 = vmatprep.subr.bf16.mxu0 0
      %277 = vmatpush1.bf16.msra.mxu0 0
      %278 = vmatprep.subr.bf16.mxu0 0
      %279 = vmatpush1.bf16.msra.mxu0 0
      %280 = vmatprep.subr.bf16.mxu0 0
      %281 = vmatpush1.bf16.msra.mxu0 0
      %282 = vmatprep.subr.bf16.mxu0 0
      %283 = vmatpush1.bf16.msra.mxu0 0
      %284 = vmatprep.subr.bf16.mxu0 0
      %285 = vmatpush1.bf16.msra.mxu0 0
      %286 = vmatprep.subr.bf16.mxu0 0
      %287 = vmatpush1.bf16.msra.mxu0 0
      %288 = vmatprep.subr.bf16.mxu0 0
      %289 = vmatpush1.bf16.msra.mxu0 0
      %290 = vmatprep.subr.bf16.mxu0 0
      %291 = vmatpush1.bf16.msra.mxu0 0
      %292 = vmatprep.subr.bf16.mxu0 0
      %293 = vmatpush1.bf16.msra.mxu0 0
      %294 = vmatprep.subr.bf16.mxu0 0
      %295 = vmatpush1.bf16.msra.mxu0 0
      %296 = vmatprep.subr.bf16.mxu0 0
      %297 = vmatpush1.bf16.msra.mxu0 0
      %298 = vmatprep.subr.bf16.mxu0 0
      %299 = vmatpush1.bf16.msra.mxu0 0
      %300 = vmatprep.subr.bf16.mxu0 0
      %301 = vmatpush1.bf16.msra.mxu0 0
      %302 = vmatprep.subr.bf16.mxu0 0
      %303 = vmatpush1.bf16.msra.mxu0 0
      %304 = vmatprep.mubr.bf16.mxu0 0
      %305 = vmatmul.mubr.bf16.gmra.mrb[0].mxu0 %v260
      %v306 = vpop.f32.mrb[0].mxu0
      %v307 = vadd.f32 0.0, %v306
      %v308 = vpop.f32.mrb[0].mxu0
      %v309 = vadd.f32 0.0, %v308
      %v310 = vpop.f32.mrb[0].mxu0
      %v311 = vpop.f32.mrb[0].mxu0
      %312 = vdwg.mxu0
      %313 = vmatprep.subr.bf16.mxu0 0
      %314 = vmatpush1.bf16.msra.mxu0 %v270
      %315 = vmatprep.subr.bf16.mxu0 0
      %316 = vmatpush1.bf16.msra.mxu0 0
      %317 = vmatprep.subr.bf16.mxu0 0
      %318 = vmatpush1.bf16.msra.mxu0 0
      %319 = vmatprep.subr.bf16.mxu0 0
      %320 = vmatpush1.bf16.msra.mxu0 0
      %321 = vmatprep.subr.bf16.mxu0 0
      %322 = vmatpush1.bf16.msra.mxu0 0
      %323 = vmatprep.subr.bf16.mxu0 0
      %324 = vmatpush1.bf16.msra.mxu0 0
      %325 = vmatprep.subr.bf16.mxu0 0
      %326 = vmatpush1.bf16.msra.mxu0 0
      %327 = vmatprep.subr.bf16.mxu0 0
      %328 = vmatpush1.bf16.msra.mxu0 0
      %329 = vmatprep.subr.bf16.mxu0 0
      %330 = vmatpush1.bf16.msra.mxu0 0
      %331 = vmatprep.subr.bf16.mxu0 0
      %332 = vmatpush1.bf16.msra.mxu0 0
      %333 = vmatprep.subr.bf16.mxu0 0
      %334 = vmatpush1.bf16.msra.mxu0 0
      %335 = vmatprep.subr.bf16.mxu0 0
      %336 = vmatpush1.bf16.msra.mxu0 0
      %337 = vmatprep.subr.bf16.mxu0 0
      %338 = vmatpush1.bf16.msra.mxu0 0
      %339 = vmatprep.subr.bf16.mxu0 0
      %340 = vmatpush1.bf16.msra.mxu0 0
      %341 = vmatprep.subr.bf16.mxu0 0
      %342 = vmatpush1.bf16.msra.mxu0 0
      %343 = vmatprep.subr.bf16.mxu0 0
      %344 = vmatpush1.bf16.msra.mxu0 0
      %345 = vmatprep.mubr.bf16.mxu0 0
      %346 = vmatmul.mubr.bf16.gmra.mrb[0].mxu0 %v260
      %v347 = vpop.f32.mrb[0].mxu0
      %v348 = vadd.f32 0.0, %v347
      %v349 = vpop.f32.mrb[0].mxu0
      %v350 = vpop.f32.mrb[0].mxu0
      %v351 = vpop.f32.mrb[0].mxu0
      %352 = vdwg.mxu0
      %v354 = vsel %vm258, %v229, 0
      %v357 = vsel %vm262, %v240, 0
      %v360 = vsel %vm262, %v248, 0
      %v363 = vsel %vm262, %v247, 0
      %365 = vmatprep.subr.bf16.mxu0 %v360
      %366 = vmatpush1.bf16.msra.mxu0 %v357
      %367 = vmatprep.subr.bf16.mxu0 0
      %368 = vmatpush1.bf16.msra.mxu0 0
      %369 = vmatprep.subr.bf16.mxu0 0
      %370 = vmatpush1.bf16.msra.mxu0 0
      %371 = vmatprep.subr.bf16.mxu0 0
      %372 = vmatpush1.bf16.msra.mxu0 0
      %373 = vmatprep.subr.bf16.mxu0 0
      %374 = vmatpush1.bf16.msra.mxu0 0
      %375 = vmatprep.subr.bf16.mxu0 0
      %376 = vmatpush1.bf16.msra.mxu0 0
      %377 = vmatprep.subr.bf16.mxu0 0
      %378 = vmatpush1.bf16.msra.mxu0 0
      %379 = vmatprep.subr.bf16.mxu0 0
      %380 = vmatpush1.bf16.msra.mxu0 0
      %381 = vmatprep.subr.bf16.mxu0 0
      %382 = vmatpush1.bf16.msra.mxu0 0
      %383 = vmatprep.subr.bf16.mxu0 0
      %384 = vmatpush1.bf16.msra.mxu0 0
      %385 = vmatprep.subr.bf16.mxu0 0
      %386 = vmatpush1.bf16.msra.mxu0 0
      %387 = vmatprep.subr.bf16.mxu0 0
      %388 = vmatpush1.bf16.msra.mxu0 0
      %389 = vmatprep.subr.bf16.mxu0 0
      %390 = vmatpush1.bf16.msra.mxu0 0
      %391 = vmatprep.subr.bf16.mxu0 0
      %392 = vmatpush1.bf16.msra.mxu0 0
      %393 = vmatprep.subr.bf16.mxu0 0
      %394 = vmatpush1.bf16.msra.mxu0 0
      %395 = vmatprep.subr.bf16.mxu0 0
      %396 = vmatpush1.bf16.msra.mxu0 0
      %397 = vmatprep.mubr.bf16.mxu0 0
      %398 = vmatmul.mubr.bf16.gmra.mrb[0].mxu0 %v354
      %v399 = vpop.f32.mrb[0].mxu0
      %v400 = vadd.f32 %v307, %v399
      %v401 = vpop.f32.mrb[0].mxu0
      %v402 = vadd.f32 %v309, %v401
      %v403 = vpop.f32.mrb[0].mxu0
      %v404 = vpop.f32.mrb[0].mxu0
      %405 = vdwg.mxu0
      %406 = vmatprep.subr.bf16.mxu0 0
      %407 = vmatpush1.bf16.msra.mxu0 %v363
      %408 = vmatprep.subr.bf16.mxu0 0
      %409 = vmatpush1.bf16.msra.mxu0 0
      %410 = vmatprep.subr.bf16.mxu0 0
      %411 = vmatpush1.bf16.msra.mxu0 0
      %412 = vmatprep.subr.bf16.mxu0 0
      %413 = vmatpush1.bf16.msra.mxu0 0
      %414 = vmatprep.subr.bf16.mxu0 0
      %415 = vmatpush1.bf16.msra.mxu0 0
      %416 = vmatprep.subr.bf16.mxu0 0
      %417 = vmatpush1.bf16.msra.mxu0 0
      %418 = vmatprep.subr.bf16.mxu0 0
      %419 = vmatpush1.bf16.msra.mxu0 0
      %420 = vmatprep.subr.bf16.mxu0 0
      %421 = vmatpush1.bf16.msra.mxu0 0
      %422 = vmatprep.subr.bf16.mxu0 0
      %423 = vmatpush1.bf16.msra.mxu0 0
      %424 = vmatprep.subr.bf16.mxu0 0
      %425 = vmatpush1.bf16.msra.mxu0 0
      %426 = vmatprep.subr.bf16.mxu0 0
      %427 = vmatpush1.bf16.msra.mxu0 0
      %428 = vmatprep.subr.bf16.mxu0 0
      %429 = vmatpush1.bf16.msra.mxu0 0
      %430 = vmatprep.subr.bf16.mxu0 0
      %431 = vmatpush1.bf16.msra.mxu0 0
      %432 = vmatprep.subr.bf16.mxu0 0
      %433 = vmatpush1.bf16.msra.mxu0 0
      %434 = vmatprep.subr.bf16.mxu0 0
      %435 = vmatpush1.bf16.msra.mxu0 0
      %436 = vmatprep.subr.bf16.mxu0 0
      %437 = vmatpush1.bf16.msra.mxu0 0
      %438 = vmatprep.mubr.bf16.mxu0 0
      %439 = vmatmul.mubr.bf16.gmra.mrb[0].mxu0 %v354
      %v440 = vpop.f32.mrb[0].mxu0
      %v441 = vadd.f32 %v348, %v440
      %v442 = vpop.f32.mrb[0].mxu0
      %v443 = vpop.f32.mrb[0].mxu0
      %v444 = vpop.f32.mrb[0].mxu0
      %445 = vdwg.mxu0
      %v446 = vld [vmem:[%s209] sm:$0x3f]
      %s447 = scalar_lea.vmem %s213, 8
      %v448 = vld [vmem:[%s447] sm:$0xf]
      %v450 = vcombine.high %v446, %v446
      %v452 = vunpack.c.l.s4 1983009808
      %v453 = vunpack.c.0.s8 %v452
      %v454 = vlaneseq
      %v455 = vshrl.u32 %v454, 7
      %v456 = vsub.s32 %v453, %v455
      %v457 = vrot.slane %v446, %v456
      %v459 = vunpack.c.l.s4 1983009808
      %v460 = vunpack.c.0.s8 %v459
      %v461 = vlaneseq
      %v462 = vshrl.u32 %v461, 7
      %v463 = vsub.s32 %v460, %v462
      %v464 = vrot.slane %v450, %v463
      %v465 = vcombine.high %v457, %v457
      %466 = vrot.lane.b32.xlu0 %v457, 126
      %v467 = vpop.permute.xlu0 %466
      %468 = vrot.lane.b32.xlu0 %v465, 126
      %v469 = vpop.permute.xlu0 %468
      %470 = vrot.lane.b32.xlu0 %v464, 126
      %v471 = vpop.permute.xlu0 %470
      %vm472 = vcmask 1031168
      %v473 = vsel %vm472, %v467, %v469
      %v474 = vsel %vm472, %v469, %v471
      %v476 = vsel %vm258, %v448, 0
      %v479 = vsel %vm262, %v473, 0
      %v482 = vsel %vm262, %v474, 0
      %v485 = vsel %vm262, %v471, 0
      %487 = vmatprep.subr.bf16.mxu0 %v482
      %488 = vmatpush1.bf16.msra.mxu0 %v479
      %489 = vmatprep.subr.bf16.mxu0 0
      %490 = vmatpush1.bf16.msra.mxu0 0
      %491 = vmatprep.subr.bf16.mxu0 0
      %492 = vmatpush1.bf16.msra.mxu0 0
      %493 = vmatprep.subr.bf16.mxu0 0
      %494 = vmatpush1.bf16.msra.mxu0 0
      %495 = vmatprep.subr.bf16.mxu0 0
      %496 = vmatpush1.bf16.msra.mxu0 0
      %497 = vmatprep.subr.bf16.mxu0 0
      %498 = vmatpush1.bf16.msra.mxu0 0
      %499 = vmatprep.subr.bf16.mxu0 0
      %500 = vmatpush1.bf16.msra.mxu0 0
      %501 = vmatprep.subr.bf16.mxu0 0
      %502 = vmatpush1.bf16.msra.mxu0 0
      %503 = vmatprep.subr.bf16.mxu0 0
      %504 = vmatpush1.bf16.msra.mxu0 0
      %505 = vmatprep.subr.bf16.mxu0 0
      %506 = vmatpush1.bf16.msra.mxu0 0
      %507 = vmatprep.subr.bf16.mxu0 0
      %508 = vmatpush1.bf16.msra.mxu0 0
      %509 = vmatprep.subr.bf16.mxu0 0
      %510 = vmatpush1.bf16.msra.mxu0 0
      %511 = vmatprep.subr.bf16.mxu0 0
      %512 = vmatpush1.bf16.msra.mxu0 0
      %513 = vmatprep.subr.bf16.mxu0 0
      %514 = vmatpush1.bf16.msra.mxu0 0
      %515 = vmatprep.subr.bf16.mxu0 0
      %516 = vmatpush1.bf16.msra.mxu0 0
      %517 = vmatprep.subr.bf16.mxu0 0
      %518 = vmatpush1.bf16.msra.mxu0 0
      %519 = vmatprep.mubr.bf16.mxu0 0
      %520 = vmatmul.mubr.bf16.gmra.mrb[0].mxu0 %v476
      %v521 = vpop.f32.mrb[0].mxu0
      %v522 = vadd.f32 0.0, %v521
      %v523 = vpop.f32.mrb[0].mxu0
      %v524 = vadd.f32 0.0, %v523
      %v525 = vpop.f32.mrb[0].mxu0
      %v526 = vpop.f32.mrb[0].mxu0
      %527 = vdwg.mxu0
      %528 = vmatprep.subr.bf16.mxu0 0
      %529 = vmatpush1.bf16.msra.mxu0 %v485
      %530 = vmatprep.subr.bf16.mxu0 0
      %531 = vmatpush1.bf16.msra.mxu0 0
      %532 = vmatprep.subr.bf16.mxu0 0
      %533 = vmatpush1.bf16.msra.mxu0 0
      %534 = vmatprep.subr.bf16.mxu0 0
      %535 = vmatpush1.bf16.msra.mxu0 0
      %536 = vmatprep.subr.bf16.mxu0 0
      %537 = vmatpush1.bf16.msra.mxu0 0
      %538 = vmatprep.subr.bf16.mxu0 0
      %539 = vmatpush1.bf16.msra.mxu0 0
      %540 = vmatprep.subr.bf16.mxu0 0
      %541 = vmatpush1.bf16.msra.mxu0 0
      %542 = vmatprep.subr.bf16.mxu0 0
      %543 = vmatpush1.bf16.msra.mxu0 0
      %544 = vmatprep.subr.bf16.mxu0 0
      %545 = vmatpush1.bf16.msra.mxu0 0
      %546 = vmatprep.subr.bf16.mxu0 0
      %547 = vmatpush1.bf16.msra.mxu0 0
      %548 = vmatprep.subr.bf16.mxu0 0
      %549 = vmatpush1.bf16.msra.mxu0 0
      %550 = vmatprep.subr.bf16.mxu0 0
      %551 = vmatpush1.bf16.msra.mxu0 0
      %552 = vmatprep.subr.bf16.mxu0 0
      %553 = vmatpush1.bf16.msra.mxu0 0
      %554 = vmatprep.subr.bf16.mxu0 0
      %555 = vmatpush1.bf16.msra.mxu0 0
      %556 = vmatprep.subr.bf16.mxu0 0
      %557 = vmatpush1.bf16.msra.mxu0 0
      %558 = vmatprep.subr.bf16.mxu0 0
      %559 = vmatpush1.bf16.msra.mxu0 0
      %560 = vmatprep.mubr.bf16.mxu0 0
      %561 = vmatmul.mubr.bf16.gmra.mrb[0].mxu0 %v476
      %v562 = vpop.f32.mrb[0].mxu0
      %v563 = vadd.f32 0.0, %v562
      %v564 = vpop.f32.mrb[0].mxu0
      %v565 = vpop.f32.mrb[0].mxu0
      %v566 = vpop.f32.mrb[0].mxu0
      %567 = vdwg.mxu0
      %v568 = vadd.f32 %v400, %v522
      %v569 = vadd.f32 %v402, %v524
      %v570 = vadd.f32 %v441, %v563
      %v571 = vld [vmem:[%s209] sm:$0x3f]
      %s572 = scalar_lea.vmem %s213, 12
      %v573 = vld [vmem:[%s572] sm:$0xf]
      %v575 = vcombine.high %v571, %v571
      %v577 = vunpack.c.l.s4 1983009808
      %v578 = vunpack.c.0.s8 %v577
      %v579 = vlaneseq
      %v580 = vshrl.u32 %v579, 7
      %v581 = vsub.s32 %v578, %v580
      %v582 = vrot.slane %v571, %v581
      %v584 = vunpack.c.l.s4 1983009808
      %v585 = vunpack.c.0.s8 %v584
      %v586 = vlaneseq
      %v587 = vshrl.u32 %v586, 7
      %v588 = vsub.s32 %v585, %v587
      %v589 = vrot.slane %v575, %v588
      %v590 = vcombine.high %v582, %v582
      %591 = vrot.lane.b32.xlu0 %v582, 110
      %v592 = vpop.permute.xlu0 %591
      %593 = vrot.lane.b32.xlu0 %v590, 110
      %v594 = vpop.permute.xlu0 %593
      %595 = vrot.lane.b32.xlu0 %v589, 110
      %v596 = vpop.permute.xlu0 %595
      %vm597 = vcmask 900096
      %v598 = vsel %vm597, %v592, %v594
      %v599 = vsel %vm597, %v594, %v596
      %v601 = vsel %vm258, %v573, 0
      %v604 = vsel %vm262, %v598, 0
      %v607 = vsel %vm262, %v599, 0
      %v610 = vsel %vm262, %v596, 0
      %612 = vmatprep.subr.bf16.mxu0 %v607
      %613 = vmatpush1.bf16.msra.mxu0 %v604
      %614 = vmatprep.subr.bf16.mxu0 0
      %615 = vmatpush1.bf16.msra.mxu0 0
      %616 = vmatprep.subr.bf16.mxu0 0
      %617 = vmatpush1.bf16.msra.mxu0 0
      %618 = vmatprep.subr.bf16.mxu0 0
      %619 = vmatpush1.bf16.msra.mxu0 0
      %620 = vmatprep.subr.bf16.mxu0 0
      %621 = vmatpush1.bf16.msra.mxu0 0
      %622 = vmatprep.subr.bf16.mxu0 0
      %623 = vmatpush1.bf16.msra.mxu0 0
      %624 = vmatprep.subr.bf16.mxu0 0
      %625 = vmatpush1.bf16.msra.mxu0 0
      %626 = vmatprep.subr.bf16.mxu0 0
      %627 = vmatpush1.bf16.msra.mxu0 0
      %628 = vmatprep.subr.bf16.mxu0 0
      %629 = vmatpush1.bf16.msra.mxu0 0
      %630 = vmatprep.subr.bf16.mxu0 0
      %631 = vmatpush1.bf16.msra.mxu0 0
      %632 = vmatprep.subr.bf16.mxu0 0
      %633 = vmatpush1.bf16.msra.mxu0 0
      %634 = vmatprep.subr.bf16.mxu0 0
      %635 = vmatpush1.bf16.msra.mxu0 0
      %636 = vmatprep.subr.bf16.mxu0 0
      %637 = vmatpush1.bf16.msra.mxu0 0
      %638 = vmatprep.subr.bf16.mxu0 0
      %639 = vmatpush1.bf16.msra.mxu0 0
      %640 = vmatprep.subr.bf16.mxu0 0
      %641 = vmatpush1.bf16.msra.mxu0 0
      %642 = vmatprep.subr.bf16.mxu0 0
      %643 = vmatpush1.bf16.msra.mxu0 0
      %644 = vmatprep.mubr.bf16.mxu0 0
      %645 = vmatmul.mubr.bf16.gmra.mrb[0].mxu0 %v601
      %v646 = vpop.f32.mrb[0].mxu0
      %v647 = vadd.f32 0.0, %v646
      %v648 = vpop.f32.mrb[0].mxu0
      %v649 = vadd.f32 0.0, %v648
      %v650 = vpop.f32.mrb[0].mxu0
      %v651 = vpop.f32.mrb[0].mxu0
      %652 = vdwg.mxu0
      %653 = vmatprep.subr.bf16.mxu0 0
      %654 = vmatpush1.bf16.msra.mxu0 %v610
      %655 = vmatprep.subr.bf16.mxu0 0
      %656 = vmatpush1.bf16.msra.mxu0 0
      %657 = vmatprep.subr.bf16.mxu0 0
      %658 = vmatpush1.bf16.msra.mxu0 0
      %659 = vmatprep.subr.bf16.mxu0 0
      %660 = vmatpush1.bf16.msra.mxu0 0
      %661 = vmatprep.subr.bf16.mxu0 0
      %662 = vmatpush1.bf16.msra.mxu0 0
      %663 = vmatprep.subr.bf16.mxu0 0
      %664 = vmatpush1.bf16.msra.mxu0 0
      %665 = vmatprep.subr.bf16.mxu0 0
      %666 = vmatpush1.bf16.msra.mxu0 0
      %667 = vmatprep.subr.bf16.mxu0 0
      %668 = vmatpush1.bf16.msra.mxu0 0
      %669 = vmatprep.subr.bf16.mxu0 0
      %670 = vmatpush1.bf16.msra.mxu0 0
      %671 = vmatprep.subr.bf16.mxu0 0
      %672 = vmatpush1.bf16.msra.mxu0 0
      %673 = vmatprep.subr.bf16.mxu0 0
      %674 = vmatpush1.bf16.msra.mxu0 0
      %675 = vmatprep.subr.bf16.mxu0 0
      %676 = vmatpush1.bf16.msra.mxu0 0
      %677 = vmatprep.subr.bf16.mxu0 0
      %678 = vmatpush1.bf16.msra.mxu0 0
      %679 = vmatprep.subr.bf16.mxu0 0
      %680 = vmatpush1.bf16.msra.mxu0 0
      %681 = vmatprep.subr.bf16.mxu0 0
      %682 = vmatpush1.bf16.msra.mxu0 0
      %683 = vmatprep.subr.bf16.mxu0 0
      %684 = vmatpush1.bf16.msra.mxu0 0
      %685 = vmatprep.mubr.bf16.mxu0 0
      %686 = vmatmul.mubr.bf16.gmra.mrb[0].mxu0 %v601
      %v687 = vpop.f32.mrb[0].mxu0
      %v688 = vadd.f32 0.0, %v687
      %v689 = vpop.f32.mrb[0].mxu0
      %v690 = vpop.f32.mrb[0].mxu0
      %v691 = vpop.f32.mrb[0].mxu0
      %692 = vdwg.mxu0
      %v693 = vadd.f32 %v568, %v647
      %v694 = vadd.f32 %v569, %v649
      %v695 = vadd.f32 %v570, %v688
      %v696 = vld [vmem:[%s209] sm:$0x3f]
      %s697 = scalar_lea.vmem %s213, 16
      %v698 = vld [vmem:[%s697] sm:$0xf]
      %v700 = vcombine.high %v696, %v696
      %v702 = vunpack.c.l.s4 1983009808
      %v703 = vunpack.c.0.s8 %v702
      %v704 = vlaneseq
      %v705 = vshrl.u32 %v704, 7
      %v706 = vsub.s32 %v703, %v705
      %v707 = vrot.slane %v696, %v706
      %v709 = vunpack.c.l.s4 1983009808
      %v710 = vunpack.c.0.s8 %v709
      %v711 = vlaneseq
      %v712 = vshrl.u32 %v711, 7
      %v713 = vsub.s32 %v710, %v712
      %v714 = vrot.slane %v700, %v713
      %v715 = vcombine.high %v707, %v707
      %716 = vrot.lane.b32.xlu0 %v707, 109
      %v717 = vpop.permute.xlu0 %716
      %718 = vrot.lane.b32.xlu0 %v715, 109
      %v719 = vpop.permute.xlu0 %718
      %720 = vrot.lane.b32.xlu0 %v714, 109
      %v721 = vpop.permute.xlu0 %720
      %vm722 = vcmask 891904
      %v723 = vsel %vm722, %v717, %v719
      %v724 = vsel %vm722, %v719, %v721
      %v726 = vsel %vm258, %v698, 0
      %v729 = vsel %vm262, %v723, 0
      %v732 = vsel %vm262, %v724, 0
      %v735 = vsel %vm262, %v721, 0
      %737 = vmatprep.subr.bf16.mxu0 %v732
      %738 = vmatpush1.bf16.msra.mxu0 %v729
      %739 = vmatprep.subr.bf16.mxu0 0
      %740 = vmatpush1.bf16.msra.mxu0 0
      %741 = vmatprep.subr.bf16.mxu0 0
      %742 = vmatpush1.bf16.msra.mxu0 0
      %743 = vmatprep.subr.bf16.mxu0 0
      %744 = vmatpush1.bf16.msra.mxu0 0
      %745 = vmatprep.subr.bf16.mxu0 0
      %746 = vmatpush1.bf16.msra.mxu0 0
      %747 = vmatprep.subr.bf16.mxu0 0
      %748 = vmatpush1.bf16.msra.mxu0 0
      %749 = vmatprep.subr.bf16.mxu0 0
      %750 = vmatpush1.bf16.msra.mxu0 0
      %751 = vmatprep.subr.bf16.mxu0 0
      %752 = vmatpush1.bf16.msra.mxu0 0
      %753 = vmatprep.subr.bf16.mxu0 0
      %754 = vmatpush1.bf16.msra.mxu0 0
      %755 = vmatprep.subr.bf16.mxu0 0
      %756 = vmatpush1.bf16.msra.mxu0 0
      %757 = vmatprep.subr.bf16.mxu0 0
      %758 = vmatpush1.bf16.msra.mxu0 0
      %759 = vmatprep.subr.bf16.mxu0 0
      %760 = vmatpush1.bf16.msra.mxu0 0
      %761 = vmatprep.subr.bf16.mxu0 0
      %762 = vmatpush1.bf16.msra.mxu0 0
      %763 = vmatprep.subr.bf16.mxu0 0
      %764 = vmatpush1.bf16.msra.mxu0 0
      %765 = vmatprep.subr.bf16.mxu0 0
      %766 = vmatpush1.bf16.msra.mxu0 0
      %767 = vmatprep.subr.bf16.mxu0 0
      %768 = vmatpush1.bf16.msra.mxu0 0
      %769 = vmatprep.mubr.bf16.mxu0 0
      %770 = vmatmul.mubr.bf16.gmra.mrb[0].mxu0 %v726
      %v771 = vpop.f32.mrb[0].mxu0
      %v772 = vadd.f32 0.0, %v771
      %v773 = vpop.f32.mrb[0].mxu0
      %v774 = vadd.f32 0.0, %v773
      %v775 = vpop.f32.mrb[0].mxu0
      %v776 = vpop.f32.mrb[0].mxu0
      %777 = vdwg.mxu0
      %778 = vmatprep.subr.bf16.mxu0 0
      %779 = vmatpush1.bf16.msra.mxu0 %v735
      %780 = vmatprep.subr.bf16.mxu0 0
      %781 = vmatpush1.bf16.msra.mxu0 0
      %782 = vmatprep.subr.bf16.mxu0 0
      %783 = vmatpush1.bf16.msra.mxu0 0
      %784 = vmatprep.subr.bf16.mxu0 0
      %785 = vmatpush1.bf16.msra.mxu0 0
      %786 = vmatprep.subr.bf16.mxu0 0
      %787 = vmatpush1.bf16.msra.mxu0 0
      %788 = vmatprep.subr.bf16.mxu0 0
      %789 = vmatpush1.bf16.msra.mxu0 0
      %790 = vmatprep.subr.bf16.mxu0 0
      %791 = vmatpush1.bf16.msra.mxu0 0
      %792 = vmatprep.subr.bf16.mxu0 0
      %793 = vmatpush1.bf16.msra.mxu0 0
      %794 = vmatprep.subr.bf16.mxu0 0
      %795 = vmatpush1.bf16.msra.mxu0 0
      %796 = vmatprep.subr.bf16.mxu0 0
      %797 = vmatpush1.bf16.msra.mxu0 0
      %798 = vmatprep.subr.bf16.mxu0 0
      %799 = vmatpush1.bf16.msra.mxu0 0
      %800 = vmatprep.subr.bf16.mxu0 0
      %801 = vmatpush1.bf16.msra.mxu0 0
      %802 = vmatprep.subr.bf16.mxu0 0
      %803 = vmatpush1.bf16.msra.mxu0 0
      %804 = vmatprep.subr.bf16.mxu0 0
      %805 = vmatpush1.bf16.msra.mxu0 0
      %806 = vmatprep.subr.bf16.mxu0 0
      %807 = vmatpush1.bf16.msra.mxu0 0
      %808 = vmatprep.subr.bf16.mxu0 0
      %809 = vmatpush1.bf16.msra.mxu0 0
      %810 = vmatprep.mubr.bf16.mxu0 0
      %811 = vmatmul.mubr.bf16.gmra.mrb[0].mxu0 %v726
      %v812 = vpop.f32.mrb[0].mxu0
      %v813 = vadd.f32 0.0, %v812
      %v814 = vpop.f32.mrb[0].mxu0
      %v815 = vpop.f32.mrb[0].mxu0
      %v816 = vpop.f32.mrb[0].mxu0
      %817 = vdwg.mxu0
      %v818 = vadd.f32 %v693, %v772
      %v819 = vadd.f32 %v694, %v774
      %v820 = vadd.f32 %v695, %v813
      %v821 = vld [vmem:[%s209] sm:$0x3f]
      %s822 = scalar_lea.vmem %s213, 20
      %v823 = vld [vmem:[%s822] sm:$0xf]
      %v825 = vcombine.high %v821, %v821
      %v827 = vunpack.c.l.s4 1983009808
      %v828 = vunpack.c.0.s8 %v827
      %v829 = vlaneseq
      %v830 = vshrl.u32 %v829, 7
      %v831 = vsub.s32 %v828, %v830
      %v832 = vrot.slane %v821, %v831
      %v834 = vunpack.c.l.s4 1983009808
      %v835 = vunpack.c.0.s8 %v834
      %v836 = vlaneseq
      %v837 = vshrl.u32 %v836, 7
      %v838 = vsub.s32 %v835, %v837
      %v839 = vrot.slane %v825, %v838
      %v840 = vcombine.high %v832, %v832
      %841 = vrot.lane.b32.xlu0 %v832, 108
      %v842 = vpop.permute.xlu0 %841
      %843 = vrot.lane.b32.xlu0 %v840, 108
      %v844 = vpop.permute.xlu0 %843
      %845 = vrot.lane.b32.xlu0 %v839, 108
      %v846 = vpop.permute.xlu0 %845
      %vm847 = vcmask 883712
      %v848 = vsel %vm847, %v842, %v844
      %v849 = vsel %vm847, %v844, %v846
      %v851 = vsel %vm258, %v823, 0
      %v854 = vsel %vm262, %v848, 0
      %v857 = vsel %vm262, %v849, 0
      %v860 = vsel %vm262, %v846, 0
      %862 = vmatprep.subr.bf16.mxu0 %v857
      %863 = vmatpush1.bf16.msra.mxu0 %v854
      %864 = vmatprep.subr.bf16.mxu0 0
      %865 = vmatpush1.bf16.msra.mxu0 0
      %866 = vmatprep.subr.bf16.mxu0 0
      %867 = vmatpush1.bf16.msra.mxu0 0
      %868 = vmatprep.subr.bf16.mxu0 0
      %869 = vmatpush1.bf16.msra.mxu0 0
      %870 = vmatprep.subr.bf16.mxu0 0
      %871 = vmatpush1.bf16.msra.mxu0 0
      %872 = vmatprep.subr.bf16.mxu0 0
      %873 = vmatpush1.bf16.msra.mxu0 0
      %874 = vmatprep.subr.bf16.mxu0 0
      %875 = vmatpush1.bf16.msra.mxu0 0
      %876 = vmatprep.subr.bf16.mxu0 0
      %877 = vmatpush1.bf16.msra.mxu0 0
      %878 = vmatprep.subr.bf16.mxu0 0
      %879 = vmatpush1.bf16.msra.mxu0 0
      %880 = vmatprep.subr.bf16.mxu0 0
      %881 = vmatpush1.bf16.msra.mxu0 0
      %882 = vmatprep.subr.bf16.mxu0 0
      %883 = vmatpush1.bf16.msra.mxu0 0
      %884 = vmatprep.subr.bf16.mxu0 0
      %885 = vmatpush1.bf16.msra.mxu0 0
      %886 = vmatprep.subr.bf16.mxu0 0
      %887 = vmatpush1.bf16.msra.mxu0 0
      %888 = vmatprep.subr.bf16.mxu0 0
      %889 = vmatpush1.bf16.msra.mxu0 0
      %890 = vmatprep.subr.bf16.mxu0 0
      %891 = vmatpush1.bf16.msra.mxu0 0
      %892 = vmatprep.subr.bf16.mxu0 0
      %893 = vmatpush1.bf16.msra.mxu0 0
      %894 = vmatprep.mubr.bf16.mxu0 0
      %895 = vmatmul.mubr.bf16.gmra.mrb[0].mxu0 %v851
      %v896 = vpop.f32.mrb[0].mxu0
      %v897 = vadd.f32 0.0, %v896
      %v898 = vpop.f32.mrb[0].mxu0
      %v899 = vadd.f32 0.0, %v898
      %v900 = vpop.f32.mrb[0].mxu0
      %v901 = vpop.f32.mrb[0].mxu0
      %902 = vdwg.mxu0
      %903 = vmatprep.subr.bf16.mxu0 0
      %904 = vmatpush1.bf16.msra.mxu0 %v860
      %905 = vmatprep.subr.bf16.mxu0 0
      %906 = vmatpush1.bf16.msra.mxu0 0
      %907 = vmatprep.subr.bf16.mxu0 0
      %908 = vmatpush1.bf16.msra.mxu0 0
      %909 = vmatprep.subr.bf16.mxu0 0
      %910 = vmatpush1.bf16.msra.mxu0 0
      %911 = vmatprep.subr.bf16.mxu0 0
      %912 = vmatpush1.bf16.msra.mxu0 0
      %913 = vmatprep.subr.bf16.mxu0 0
      %914 = vmatpush1.bf16.msra.mxu0 0
      %915 = vmatprep.subr.bf16.mxu0 0
      %916 = vmatpush1.bf16.msra.mxu0 0
      %917 = vmatprep.subr.bf16.mxu0 0
      %918 = vmatpush1.bf16.msra.mxu0 0
      %919 = vmatprep.subr.bf16.mxu0 0
      %920 = vmatpush1.bf16.msra.mxu0 0
      %921 = vmatprep.subr.bf16.mxu0 0
      %922 = vmatpush1.bf16.msra.mxu0 0
      %923 = vmatprep.subr.bf16.mxu0 0
      %924 = vmatpush1.bf16.msra.mxu0 0
      %925 = vmatprep.subr.bf16.mxu0 0
      %926 = vmatpush1.bf16.msra.mxu0 0
      %927 = vmatprep.subr.bf16.mxu0 0
      %928 = vmatpush1.bf16.msra.mxu0 0
      %929 = vmatprep.subr.bf16.mxu0 0
      %930 = vmatpush1.bf16.msra.mxu0 0
      %931 = vmatprep.subr.bf16.mxu0 0
      %932 = vmatpush1.bf16.msra.mxu0 0
      %933 = vmatprep.subr.bf16.mxu0 0
      %934 = vmatpush1.bf16.msra.mxu0 0
      %935 = vmatprep.mubr.bf16.mxu0 0
      %936 = vmatmul.mubr.bf16.gmra.mrb[0].mxu0 %v851
      %v937 = vpop.f32.mrb[0].mxu0
      %v938 = vadd.f32 0.0, %v937
      %v939 = vpop.f32.mrb[0].mxu0
      %v940 = vpop.f32.mrb[0].mxu0
      %v941 = vpop.f32.mrb[0].mxu0
      %942 = vdwg.mxu0
      %v943 = vadd.f32 %v818, %v897
      %v944 = vadd.f32 %v819, %v899
      %v945 = vadd.f32 %v820, %v938
      %v946 = vld [vmem:[%s209] sm:$0x3f]
      %s947 = scalar_lea.vmem %s213, 24
      %v948 = vld [vmem:[%s947] sm:$0xf]
      %v950 = vcombine.high %v946, %v946
      %v952 = vunpack.c.l.s4 1983009808
      %v953 = vunpack.c.0.s8 %v952
      %v954 = vlaneseq
      %v955 = vshrl.u32 %v954, 7
      %v956 = vsub.s32 %v953, %v955
      %v957 = vrot.slane %v946, %v956
      %v959 = vunpack.c.l.s4 1983009808
      %v960 = vunpack.c.0.s8 %v959
      %v961 = vlaneseq
      %v962 = vshrl.u32 %v961, 7
      %v963 = vsub.s32 %v960, %v962
      %v964 = vrot.slane %v950, %v963
      %v965 = vcombine.high %v957, %v957
      %966 = vrot.lane.b32.xlu0 %v957, 92
      %v967 = vpop.permute.xlu0 %966
      %968 = vrot.lane.b32.xlu0 %v965, 92
      %v969 = vpop.permute.xlu0 %968
      %970 = vrot.lane.b32.xlu0 %v964, 92
      %v971 = vpop.permute.xlu0 %970
      %vm972 = vcmask 752640
      %v973 = vsel %vm972, %v967, %v969
      %v974 = vsel %vm972, %v969, %v971
      %v976 = vsel %vm258, %v948, 0
      %v979 = vsel %vm262, %v973, 0
      %v982 = vsel %vm262, %v974, 0
      %v985 = vsel %vm262, %v971, 0
      %987 = vmatprep.subr.bf16.mxu0 %v982
      %988 = vmatpush1.bf16.msra.mxu0 %v979
      %989 = vmatprep.subr.bf16.mxu0 0
      %990 = vmatpush1.bf16.msra.mxu0 0
      %991 = vmatprep.subr.bf16.mxu0 0
      %992 = vmatpush1.bf16.msra.mxu0 0
      %993 = vmatprep.subr.bf16.mxu0 0
      %994 = vmatpush1.bf16.msra.mxu0 0
      %995 = vmatprep.subr.bf16.mxu0 0
      %996 = vmatpush1.bf16.msra.mxu0 0
      %997 = vmatprep.subr.bf16.mxu0 0
      %998 = vmatpush1.bf16.msra.mxu0 0
      %999 = vmatprep.subr.bf16.mxu0 0
      %1000 = vmatpush1.bf16.msra.mxu0 0
      %1001 = vmatprep.subr.bf16.mxu0 0
      %1002 = vmatpush1.bf16.msra.mxu0 0
      %1003 = vmatprep.subr.bf16.mxu0 0
      %1004 = vmatpush1.bf16.msra.mxu0 0
      %1005 = vmatprep.subr.bf16.mxu0 0
      %1006 = vmatpush1.bf16.msra.mxu0 0
      %1007 = vmatprep.subr.bf16.mxu0 0
      %1008 = vmatpush1.bf16.msra.mxu0 0
      %1009 = vmatprep.subr.bf16.mxu0 0
      %1010 = vmatpush1.bf16.msra.mxu0 0
      %1011 = vmatprep.subr.bf16.mxu0 0
      %1012 = vmatpush1.bf16.msra.mxu0 0
      %1013 = vmatprep.subr.bf16.mxu0 0
      %1014 = vmatpush1.bf16.msra.mxu0 0
      %1015 = vmatprep.subr.bf16.mxu0 0
      %1016 = vmatpush1.bf16.msra.mxu0 0
      %1017 = vmatprep.subr.bf16.mxu0 0
      %1018 = vmatpush1.bf16.msra.mxu0 0
      %1019 = vmatprep.mubr.bf16.mxu0 0
      %1020 = vmatmul.mubr.bf16.gmra.mrb[0].mxu0 %v976
      %v1021 = vpop.f32.mrb[0].mxu0
      %v1022 = vadd.f32 0.0, %v1021
      %v1023 = vpop.f32.mrb[0].mxu0
      %v1024 = vadd.f32 0.0, %v1023
      %v1025 = vpop.f32.mrb[0].mxu0
      %v1026 = vpop.f32.mrb[0].mxu0
      %1027 = vdwg.mxu0
      %1028 = vmatprep.subr.bf16.mxu0 0
      %1029 = vmatpush1.bf16.msra.mxu0 %v985
      %1030 = vmatprep.subr.bf16.mxu0 0
      %1031 = vmatpush1.bf16.msra.mxu0 0
      %1032 = vmatprep.subr.bf16.mxu0 0
      %1033 = vmatpush1.bf16.msra.mxu0 0
      %1034 = vmatprep.subr.bf16.mxu0 0
      %1035 = vmatpush1.bf16.msra.mxu0 0
      %1036 = vmatprep.subr.bf16.mxu0 0
      %1037 = vmatpush1.bf16.msra.mxu0 0
      %1038 = vmatprep.subr.bf16.mxu0 0
      %1039 = vmatpush1.bf16.msra.mxu0 0
      %1040 = vmatprep.subr.bf16.mxu0 0
      %1041 = vmatpush1.bf16.msra.mxu0 0
      %1042 = vmatprep.subr.bf16.mxu0 0
      %1043 = vmatpush1.bf16.msra.mxu0 0
      %1044 = vmatprep.subr.bf16.mxu0 0
      %1045 = vmatpush1.bf16.msra.mxu0 0
      %1046 = vmatprep.subr.bf16.mxu0 0
      %1047 = vmatpush1.bf16.msra.mxu0 0
      %1048 = vmatprep.subr.bf16.mxu0 0
      %1049 = vmatpush1.bf16.msra.mxu0 0
      %1050 = vmatprep.subr.bf16.mxu0 0
      %1051 = vmatpush1.bf16.msra.mxu0 0
      %1052 = vmatprep.subr.bf16.mxu0 0
      %1053 = vmatpush1.bf16.msra.mxu0 0
      %1054 = vmatprep.subr.bf16.mxu0 0
      %1055 = vmatpush1.bf16.msra.mxu0 0
      %1056 = vmatprep.subr.bf16.mxu0 0
      %1057 = vmatpush1.bf16.msra.mxu0 0
      %1058 = vmatprep.subr.bf16.mxu0 0
      %1059 = vmatpush1.bf16.msra.mxu0 0
      %1060 = vmatprep.mubr.bf16.mxu0 0
      %1061 = vmatmul.mubr.bf16.gmra.mrb[0].mxu0 %v976
      %v1062 = vpop.f32.mrb[0].mxu0
      %v1063 = vadd.f32 0.0, %v1062
      %v1064 = vpop.f32.mrb[0].mxu0
      %v1065 = vpop.f32.mrb[0].mxu0
      %v1066 = vpop.f32.mrb[0].mxu0
      %1067 = vdwg.mxu0
      %v1068 = vadd.f32 %v943, %v1022
      %v1069 = vadd.f32 %v944, %v1024
      %v1070 = vadd.f32 %v945, %v1063
      %v1071 = vld [vmem:[%s209] sm:$0x3f]
      %s1072 = scalar_lea.vmem %s213, 28
      %v1073 = vld [vmem:[%s1072] sm:$0xf]
      %v1075 = vcombine.high %v1071, %v1071
      %v1077 = vunpack.c.l.s4 1983009808
      %v1078 = vunpack.c.0.s8 %v1077
      %v1079 = vlaneseq
      %v1080 = vshrl.u32 %v1079, 7
      %v1081 = vsub.s32 %v1078, %v1080
      %v1082 = vrot.slane %v1071, %v1081
      %v1084 = vunpack.c.l.s4 1983009808
      %v1085 = vunpack.c.0.s8 %v1084
      %v1086 = vlaneseq
      %v1087 = vshrl.u32 %v1086, 7
      %v1088 = vsub.s32 %v1085, %v1087
      %v1089 = vrot.slane %v1075, %v1088
      %v1090 = vcombine.high %v1082, %v1082
      %1091 = vrot.lane.b32.xlu0 %v1082, 91
      %v1092 = vpop.permute.xlu0 %1091
      %1093 = vrot.lane.b32.xlu0 %v1090, 91
      %v1094 = vpop.permute.xlu0 %1093
      %1095 = vrot.lane.b32.xlu0 %v1089, 91
      %v1096 = vpop.permute.xlu0 %1095
      %vm1097 = vcmask 744448
      %v1098 = vsel %vm1097, %v1092, %v1094
      %v1099 = vsel %vm1097, %v1094, %v1096
      %v1101 = vsel %vm258, %v1073, 0
      %v1104 = vsel %vm262, %v1098, 0
      %v1107 = vsel %vm262, %v1099, 0
      %v1110 = vsel %vm262, %v1096, 0
      %1112 = vmatprep.subr.bf16.mxu0 %v1107
      %1113 = vmatpush1.bf16.msra.mxu0 %v1104
      %1114 = vmatprep.subr.bf16.mxu0 0
      %1115 = vmatpush1.bf16.msra.mxu0 0
      %1116 = vmatprep.subr.bf16.mxu0 0
      %1117 = vmatpush1.bf16.msra.mxu0 0
      %1118 = vmatprep.subr.bf16.mxu0 0
      %1119 = vmatpush1.bf16.msra.mxu0 0
      %1120 = vmatprep.subr.bf16.mxu0 0
      %1121 = vmatpush1.bf16.msra.mxu0 0
      %1122 = vmatprep.subr.bf16.mxu0 0
      %1123 = vmatpush1.bf16.msra.mxu0 0
      %1124 = vmatprep.subr.bf16.mxu0 0
      %1125 = vmatpush1.bf16.msra.mxu0 0
      %1126 = vmatprep.subr.bf16.mxu0 0
      %1127 = vmatpush1.bf16.msra.mxu0 0
      %1128 = vmatprep.subr.bf16.mxu0 0
      %1129 = vmatpush1.bf16.msra.mxu0 0
      %1130 = vmatprep.subr.bf16.mxu0 0
      %1131 = vmatpush1.bf16.msra.mxu0 0
      %1132 = vmatprep.subr.bf16.mxu0 0
      %1133 = vmatpush1.bf16.msra.mxu0 0
      %1134 = vmatprep.subr.bf16.mxu0 0
      %1135 = vmatpush1.bf16.msra.mxu0 0
      %1136 = vmatprep.subr.bf16.mxu0 0
      %1137 = vmatpush1.bf16.msra.mxu0 0
      %1138 = vmatprep.subr.bf16.mxu0 0
      %1139 = vmatpush1.bf16.msra.mxu0 0
      %1140 = vmatprep.subr.bf16.mxu0 0
      %1141 = vmatpush1.bf16.msra.mxu0 0
      %1142 = vmatprep.subr.bf16.mxu0 0
      %1143 = vmatpush1.bf16.msra.mxu0 0
      %1144 = vmatprep.mubr.bf16.mxu0 0
      %1145 = vmatmul.mubr.bf16.gmra.mrb[0].mxu0 %v1101
      %v1146 = vpop.f32.mrb[0].mxu0
      %v1147 = vadd.f32 0.0, %v1146
      %v1148 = vpop.f32.mrb[0].mxu0
      %v1149 = vadd.f32 0.0, %v1148
      %v1150 = vpop.f32.mrb[0].mxu0
      %v1151 = vpop.f32.mrb[0].mxu0
      %1152 = vdwg.mxu0
      %1153 = vmatprep.subr.bf16.mxu0 0
      %1154 = vmatpush1.bf16.msra.mxu0 %v1110
      %1155 = vmatprep.subr.bf16.mxu0 0
      %1156 = vmatpush1.bf16.msra.mxu0 0
      %1157 = vmatprep.subr.bf16.mxu0 0
      %1158 = vmatpush1.bf16.msra.mxu0 0
      %1159 = vmatprep.subr.bf16.mxu0 0
      %1160 = vmatpush1.bf16.msra.mxu0 0
      %1161 = vmatprep.subr.bf16.mxu0 0
      %1162 = vmatpush1.bf16.msra.mxu0 0
      %1163 = vmatprep.subr.bf16.mxu0 0
      %1164 = vmatpush1.bf16.msra.mxu0 0
      %1165 = vmatprep.subr.bf16.mxu0 0
      %1166 = vmatpush1.bf16.msra.mxu0 0
      %1167 = vmatprep.subr.bf16.mxu0 0
      %1168 = vmatpush1.bf16.msra.mxu0 0
      %1169 = vmatprep.subr.bf16.mxu0 0
      %1170 = vmatpush1.bf16.msra.mxu0 0
      %1171 = vmatprep.subr.bf16.mxu0 0
      %1172 = vmatpush1.bf16.msra.mxu0 0
      %1173 = vmatprep.subr.bf16.mxu0 0
      %1174 = vmatpush1.bf16.msra.mxu0 0
      %1175 = vmatprep.subr.bf16.mxu0 0
      %1176 = vmatpush1.bf16.msra.mxu0 0
      %1177 = vmatprep.subr.bf16.mxu0 0
      %1178 = vmatpush1.bf16.msra.mxu0 0
      %1179 = vmatprep.subr.bf16.mxu0 0
      %1180 = vmatpush1.bf16.msra.mxu0 0
      %1181 = vmatprep.subr.bf16.mxu0 0
      %1182 = vmatpush1.bf16.msra.mxu0 0
      %1183 = vmatprep.subr.bf16.mxu0 0
      %1184 = vmatpush1.bf16.msra.mxu0 0
      %1185 = vmatprep.mubr.bf16.mxu0 0
      %1186 = vmatmul.mubr.bf16.gmra.mrb[0].mxu0 %v1101
      %v1187 = vpop.f32.mrb[0].mxu0
      %v1188 = vadd.f32 0.0, %v1187
      %v1189 = vpop.f32.mrb[0].mxu0
      %v1190 = vpop.f32.mrb[0].mxu0
      %v1191 = vpop.f32.mrb[0].mxu0
      %1192 = vdwg.mxu0
      %v1193 = vadd.f32 %v1068, %v1147
      %v1194 = vadd.f32 %v1069, %v1149
      %v1195 = vadd.f32 %v1070, %v1188
      %v1196 = vld [vmem:[%s209] sm:$0x3f]
      %s1197 = scalar_lea.vmem %s213, 32
      %v1198 = vld [vmem:[%s1197] sm:$0xf]
      %v1200 = vcombine.high %v1196, %v1196
      %v1202 = vunpack.c.l.s4 1983009808
      %v1203 = vunpack.c.0.s8 %v1202
      %v1204 = vlaneseq
      %v1205 = vshrl.u32 %v1204, 7
      %v1206 = vsub.s32 %v1203, %v1205
      %v1207 = vrot.slane %v1196, %v1206
      %v1209 = vunpack.c.l.s4 1983009808
      %v1210 = vunpack.c.0.s8 %v1209
      %v1211 = vlaneseq
      %v1212 = vshrl.u32 %v1211, 7
      %v1213 = vsub.s32 %v1210, %v1212
      %v1214 = vrot.slane %v1200, %v1213
      %v1215 = vcombine.high %v1207, %v1207
      %1216 = vrot.lane.b32.xlu0 %v1207, 90
      %v1217 = vpop.permute.xlu0 %1216
      %1218 = vrot.lane.b32.xlu0 %v1215, 90
      %v1219 = vpop.permute.xlu0 %1218
      %1220 = vrot.lane.b32.xlu0 %v1214, 90
      %v1221 = vpop.permute.xlu0 %1220
      %vm1222 = vcmask 736256
      %v1223 = vsel %vm1222, %v1217, %v1219
      %v1224 = vsel %vm1222, %v1219, %v1221
      %v1226 = vsel %vm258, %v1198, 0
      %v1229 = vsel %vm262, %v1223, 0
      %v1232 = vsel %vm262, %v1224, 0
      %v1235 = vsel %vm262, %v1221, 0
      %1237 = vmatprep.subr.bf16.mxu0 %v1232
      %1238 = vmatpush1.bf16.msra.mxu0 %v1229
      %1239 = vmatprep.subr.bf16.mxu0 0
      %1240 = vmatpush1.bf16.msra.mxu0 0
      %1241 = vmatprep.subr.bf16.mxu0 0
      %1242 = vmatpush1.bf16.msra.mxu0 0
      %1243 = vmatprep.subr.bf16.mxu0 0
      %1244 = vmatpush1.bf16.msra.mxu0 0
      %1245 = vmatprep.subr.bf16.mxu0 0
      %1246 = vmatpush1.bf16.msra.mxu0 0
      %1247 = vmatprep.subr.bf16.mxu0 0
      %1248 = vmatpush1.bf16.msra.mxu0 0
      %1249 = vmatprep.subr.bf16.mxu0 0
      %1250 = vmatpush1.bf16.msra.mxu0 0
      %1251 = vmatprep.subr.bf16.mxu0 0
      %1252 = vmatpush1.bf16.msra.mxu0 0
      %1253 = vmatprep.subr.bf16.mxu0 0
      %1254 = vmatpush1.bf16.msra.mxu0 0
      %1255 = vmatprep.subr.bf16.mxu0 0
      %1256 = vmatpush1.bf16.msra.mxu0 0
      %1257 = vmatprep.subr.bf16.mxu0 0
      %1258 = vmatpush1.bf16.msra.mxu0 0
      %1259 = vmatprep.subr.bf16.mxu0 0
      %1260 = vmatpush1.bf16.msra.mxu0 0
      %1261 = vmatprep.subr.bf16.mxu0 0
      %1262 = vmatpush1.bf16.msra.mxu0 0
      %1263 = vmatprep.subr.bf16.mxu0 0
      %1264 = vmatpush1.bf16.msra.mxu0 0
      %1265 = vmatprep.subr.bf16.mxu0 0
      %1266 = vmatpush1.bf16.msra.mxu0 0
      %1267 = vmatprep.subr.bf16.mxu0 0
      %1268 = vmatpush1.bf16.msra.mxu0 0
      %1269 = vmatprep.mubr.bf16.mxu0 0
      %1270 = vmatmul.mubr.bf16.gmra.mrb[0].mxu0 %v1226
      %v1271 = vpop.f32.mrb[0].mxu0
      %v1272 = vadd.f32 0.0, %v1271
      %v1273 = vpop.f32.mrb[0].mxu0
      %v1274 = vadd.f32 0.0, %v1273
      %v1275 = vpop.f32.mrb[0].mxu0
      %v1276 = vpop.f32.mrb[0].mxu0
      %1277 = vdwg.mxu0
      %1278 = vmatprep.subr.bf16.mxu0 0
      %1279 = vmatpush1.bf16.msra.mxu0 %v1235
      %1280 = vmatprep.subr.bf16.mxu0 0
      %1281 = vmatpush1.bf16.msra.mxu0 0
      %1282 = vmatprep.subr.bf16.mxu0 0
      %1283 = vmatpush1.bf16.msra.mxu0 0
      %1284 = vmatprep.subr.bf16.mxu0 0
      %1285 = vmatpush1.bf16.msra.mxu0 0
      %1286 = vmatprep.subr.bf16.mxu0 0
      %1287 = vmatpush1.bf16.msra.mxu0 0
      %1288 = vmatprep.subr.bf16.mxu0 0
      %1289 = vmatpush1.bf16.msra.mxu0 0
      %1290 = vmatprep.subr.bf16.mxu0 0
      %1291 = vmatpush1.bf16.msra.mxu0 0
      %1292 = vmatprep.subr.bf16.mxu0 0
      %1293 = vmatpush1.bf16.msra.mxu0 0
      %1294 = vmatprep.subr.bf16.mxu0 0
      %1295 = vmatpush1.bf16.msra.mxu0 0
      %1296 = vmatprep.subr.bf16.mxu0 0
      %1297 = vmatpush1.bf16.msra.mxu0 0
      %1298 = vmatprep.subr.bf16.mxu0 0
      %1299 = vmatpush1.bf16.msra.mxu0 0
      %1300 = vmatprep.subr.bf16.mxu0 0
      %1301 = vmatpush1.bf16.msra.mxu0 0
      %1302 = vmatprep.subr.bf16.mxu0 0
      %1303 = vmatpush1.bf16.msra.mxu0 0
      %1304 = vmatprep.subr.bf16.mxu0 0
      %1305 = vmatpush1.bf16.msra.mxu0 0
      %1306 = vmatprep.subr.bf16.mxu0 0
      %1307 = vmatpush1.bf16.msra.mxu0 0
      %1308 = vmatprep.subr.bf16.mxu0 0
      %1309 = vmatpush1.bf16.msra.mxu0 0
      %1310 = vmatprep.mubr.bf16.mxu0 0
      %1311 = vmatmul.mubr.bf16.gmra.mrb[0].mxu0 %v1226
      %v1312 = vpop.f32.mrb[0].mxu0
      %v1313 = vadd.f32 0.0, %v1312
      %v1314 = vpop.f32.mrb[0].mxu0
      %v1315 = vpop.f32.mrb[0].mxu0
      %v1316 = vpop.f32.mrb[0].mxu0
      %1317 = vdwg.mxu0
      %v1318 = vadd.f32 %v1193, %v1272
      %v1319 = vadd.f32 %v1194, %v1274
      %v1320 = vadd.f32 %v1195, %v1313
      %v1321 = vld [vmem:[%s217] sm:$0xff]
      %1323 = vset.pattern.permute.xlu0 0
      %1324 = vperm.xlu0 %1323, %v1321
      %v1325 = vpop.permute.xlu0 %1324
      %v1327 = vadd.f32 %v1318, %v1325
      %v1328 = vadd.f32 %v1319, %v1325
      %v1329 = vadd.f32 %v1320, %v1325
      %1330 = vst [vmem:[%s226] sm:$0xff] %v1327
      %1331 = vst [vmem:[%s226 + $0x8] sm:$0xff] %v1328
      %vm1332 = vcmask 244736
      %1333 = vst.msk [vmem:[%s226 + $0x10] sm:$0xff] %vm1332, %v1329
      %p1334 = scmp.lt.s32.totalorder %s18, 1
      %s1335 = scalar_select %p1334, %s18, 1
      %p1336 = scmp.lt.s32.totalorder %s19, 0
      %s1337 = scalar_select %p1336, %s19, 0
      %s1338 = smul.addr %s1337, 3
      %s1339 = smul.addr %s1335, 3
      %s1340 = sadd.s32 %s1338, %s1339
      %s1341 = smul.addr %s1340, 8
      %s1342 = scalar_lea.vmem %s3, %s1341
      // Predicated region
      $region33: #{conv_layer_forward.1} parent=31 // pred_check
        %p1343 = pneg %p124
      $region34: #{conv_layer_forward.1} parent=31 // pred_check_branch
        %1345 = sbr.rel (%p1343) target = $region36
      $region35: #{conv_layer_forward.1} parent=31 // pred_region
        _
      $region36: #{conv_layer_forward.1} parent=31 // pred_fallthru
        _
    $region32: #{conv_layer_forward.1} parent=5 // pred_fallthru
      _
    %p1346 = scmp.le.s32.totalorder 2, %s9
    // Predicated region
    $region37: #{conv_layer_forward.1} parent=5 // pred_check
      %p1347 = pneg %p1346
    $region38: #{conv_layer_forward.1} parent=5 // pred_check_branch
      %1349 = sbr.rel (%p1347) target = $region40
    $region39: #{conv_layer_forward.1} parent=5 // pred_region
      %s1350 = ssub.s32 %s9, 2
      // Predicated region
      $region41: #{conv_layer_forward.1} parent=39 // pred_check
        %p1351 = pneg %p130
      $region42: #{conv_layer_forward.1} parent=39 // pred_check_branch
        %1353 = sbr.rel (%p1351) target = $region44
      $region43: #{conv_layer_forward.1} parent=39 // pred_region
        %p1354 = scmp.lt.s32.totalorder %s20, 1
        %s1355 = scalar_select %p1354, %s20, 1
        %p1356 = scmp.lt.s32.totalorder %s21, 0
        %s1357 = scalar_select %p1356, %s21, 0
        %s1358 = smul.addr %s1357, 3
        %s1359 = smul.addr %s1355, 3
        %s1360 = sadd.s32 %s1358, %s1359
        %s1361 = smul.addr %s1360, 8
        %s1362 = scalar_lea.vmem %s3, %s1361
      $region44: #{conv_layer_forward.1} parent=39 // pred_fallthru
        _
    $region40: #{conv_layer_forward.1} parent=5 // pred_fallthru
      _
  $region6: #{conv_layer_forward.1} parent=0 // loop_footer
    %s13 = sadd.s32 1, %s9
  $region7: #{conv_layer_forward.1} parent=0 // loop_footer_branch
    %8 = sbr.rel target = $region3
  $region8: #{conv_layer_forward.1} parent=0 // loop_exit
    _

</llo_original>
